<compile_context>
chip_gen: v5e
topology: v5e:2x2
jax: 0.10.0
libtpu: 0.0.40
codegen_flags: <defaults>
</compile_context>

<pallas_src>
import functools

import jax
import jax.numpy as jnp
from jax.experimental import pallas as pl
from jax.experimental.pallas import tpu as pltpu

FEAT = 1920   # densenet201 feature dim
H1 = 128      # fc1 out
H2 = 50       # fc2 out (true width)
H2P = 128     # fc2 out padded to a full lane width


def _round_up(n, m):
    return ((n + m - 1) // m) * m


def _head_kernel(x_ref, w1_ref, b1_ref, w2_ref, b2_ref, out_ref, e1_ref):
    # fc1 + ReLU: bf16 inputs, f32 MXU accumulation.
    h = jnp.dot(x_ref[...], w1_ref[...],
                preferred_element_type=jnp.float32) + b1_ref[...]
    e1 = jnp.maximum(h, 0.0)
    e1_ref[...] = e1.astype(e1_ref.dtype)

    # F.dropout(e1, training=False) == identity (inference semantics).

    # fc2 on the lane-dense padded width (128); extra columns have zero
    # weight/bias, so the padded lanes are exact zeros + sliced off outside.
    out = jnp.dot(e1, w2_ref[...],
                  preferred_element_type=jnp.float32) + b2_ref[...]
    out_ref[...] = out.astype(out_ref.dtype)


@functools.partial(jax.jit, static_argnames=())
def dense_net_head(features, w1, b1, w2, b2):
    """features: (B, 1920) f32. Returns (x, e1) = ((B, 50), (B, 128)) f32."""
    B = features.shape[0]

    # Batch tile: multiple of 16 (bf16 sublane packing), capped at 256 so the
    # double-buffered feature tiles fit scoped VMEM on all generations.
    TB = min(256, _round_up(max(B, 1), 16))
    Bp = _round_up(B, TB)
    n_tiles = Bp // TB

    # Pad batch; cast the HBM-dominant operands to bf16.
    feats = features
    if Bp != B:
        feats = jnp.pad(feats, ((0, Bp - B), (0, 0)))
    feats_bf16 = feats.astype(jnp.bfloat16)
    w1_bf16 = w1.astype(jnp.bfloat16)

    # fc2: pad 50 -> 128 output lanes (zero weights/bias), slice back after.
    w2p = jnp.zeros((H1, H2P), jnp.float32).at[:, :H2].set(w2)
    b2p = jnp.zeros((1, H2P), jnp.float32).at[0, :H2].set(b2)
    b1_2d = b1.reshape(1, H1).astype(jnp.float32)

    out_shapes = (
        jax.ShapeDtypeStruct((Bp, H2P), jnp.float32),  # x  (padded fc2 output)
        jax.ShapeDtypeStruct((Bp, H1), jnp.float32),   # e1 (relu(fc1) output)
    )

    grid_spec = pltpu.PrefetchScalarGridSpec(
        num_scalar_prefetch=0,
        grid=(n_tiles,),
        in_specs=[
            pl.BlockSpec((TB, FEAT), lambda i: (i, 0)),   # features tile
            pl.BlockSpec((FEAT, H1), lambda i: (0, 0)),   # W1 resident
            pl.BlockSpec((1, H1), lambda i: (0, 0)),      # b1 resident
            pl.BlockSpec((H1, H2P), lambda i: (0, 0)),    # W2 (padded) resident
            pl.BlockSpec((1, H2P), lambda i: (0, 0)),     # b2 (padded) resident
        ],
        out_specs=[
            pl.BlockSpec((TB, H2P), lambda i: (i, 0)),
            pl.BlockSpec((TB, H1), lambda i: (i, 0)),
        ],
    )

    cost = pl.CostEstimate(
        flops=2 * Bp * (FEAT * H1 + H1 * H2P),
        transcendentals=0,
        bytes_accessed=(
            feats_bf16.size * 2 + w1_bf16.size * 2     # bf16 inputs
            + (b1_2d.size + w2p.size + b2p.size) * 4   # f32 small params
            + Bp * (H2P + H1) * 4                      # f32 outputs
        ),
    )

    x_pad, e1_full = pl.pallas_call(
        _head_kernel,
        out_shape=out_shapes,
        grid_spec=grid_spec,
        compiler_params=pltpu.CompilerParams(
            dimension_semantics=("parallel",),
        ),
        cost_estimate=cost,
    )(feats_bf16, w1_bf16, b1_2d, w2p, b2p)

    # Strip batch padding and the fc2 lane padding.
    return x_pad[:B, :H2], e1_full[:B, :]


def _init_params(key):
    """Deterministic parameter init matching nn.Linear shapes.

    PyTorch Linear stores W as (out, in); we keep the transposed (in, out)
    layout so the kernel computes x @ W directly.
    """
    k1, k2, k3, k4 = jax.random.split(key, 4)
    lim1 = 1.0 / jnp.sqrt(FEAT)
    lim2 = 1.0 / jnp.sqrt(H1)
    w1 = jax.random.uniform(k1, (FEAT, H1), jnp.float32, -lim1, lim1)
    b1 = jax.random.uniform(k2, (H1,), jnp.float32, -lim1, lim1)
    w2 = jax.random.uniform(k3, (H1, H2), jnp.float32, -lim2, lim2)
    b2 = jax.random.uniform(k4, (H2,), jnp.float32, -lim2, lim2)
    return w1, b1, w2, b2


if __name__ == "__main__":
    key = jax.random.PRNGKey(0)
    kx, kp = jax.random.split(key)

    B = 8
    # Stand-in for densenet201 features (see TODO above): (B, 1920) f32.
    features = jax.random.normal(kx, (B, FEAT), jnp.float32)
    w1, b1, w2, b2 = _init_params(kp)

    x_out, e1_out = dense_net_head(features, w1, b1, w2, b2)
    jax.block_until_ready((x_out, e1_out))

    # Reference in plain f32 JAX (same semantics as the PyTorch forward).
    # Tolerance loosened because fc1 runs on the bf16 MXU path in the kernel.
    e1_ref = jnp.maximum(features @ w1 + b1, 0.0)
    x_ref = e1_ref @ w2 + b2
    assert x_out.shape == (B, H2) and e1_out.shape == (B, H1)
    assert jnp.allclose(e1_out, e1_ref, atol=2e-2, rtol=2e-2)
    assert jnp.allclose(x_out, x_ref, atol=2e-2, rtol=2e-2)

    print("KERNEL_OK")
</pallas_src>

<mosaic_0001>
module attributes {stable_mosaic.version = 11 : i64} {
  func.func @_head_kernel(%arg0: i32, %arg1: memref<16x1920xbf16, #tpu.memory_space<vmem>>, %arg2: memref<1920x128xbf16, #tpu.memory_space<vmem>>, %arg3: memref<1x128xf32, #tpu.memory_space<vmem>>, %arg4: memref<128x128xf32, #tpu.memory_space<vmem>>, %arg5: memref<1x128xf32, #tpu.memory_space<vmem>>, %arg6: memref<16x128xf32, #tpu.memory_space<vmem>>, %arg7: memref<16x128xf32, #tpu.memory_space<vmem>>) attributes {dimension_semantics = [#tpu.dimension_semantics<parallel>], iteration_bounds = array<i64: 1>, scalar_prefetch = 0 : i64, scratch_operands = 0 : i64, tpu.core_type = #tpu.core_type<tc>, window_params = [{transform_indices = @transform_0, window_bounds = array<i64: 16, 1920>}, {pipeline_mode = #tpu.pipeline_mode<synchronous>, transform_indices = @transform_1, window_bounds = array<i64: 1920, 128>}, {pipeline_mode = #tpu.pipeline_mode<synchronous>, transform_indices = @transform_2, window_bounds = array<i64: 1, 128>}, {pipeline_mode = #tpu.pipeline_mode<synchronous>, transform_indices = @transform_3, window_bounds = array<i64: 128, 128>}, {pipeline_mode = #tpu.pipeline_mode<synchronous>, transform_indices = @transform_4, window_bounds = array<i64: 1, 128>}, {transform_indices = @transform_5, window_bounds = array<i64: 16, 128>}, {transform_indices = @transform_6, window_bounds = array<i64: 16, 128>}]} {
    %c0 = arith.constant 0 : index
    %c0_0 = arith.constant 0 : index
    %0 = vector.load %arg1[%c0, %c0_0] : memref<16x1920xbf16, #tpu.memory_space<vmem>>, vector<16x1920xbf16>
    %c0_1 = arith.constant 0 : index
    %c0_2 = arith.constant 0 : index
    %1 = vector.load %arg2[%c0_1, %c0_2] : memref<1920x128xbf16, #tpu.memory_space<vmem>>, vector<1920x128xbf16>
    %cst = arith.constant dense<0.000000e+00> : vector<16x128xf32>
    %2 = tpu.matmul %0, %1, %cst {dimension_numbers = #tpu.dot_dimension_numbers<[1], [0], [0], [1], [0, 0, 1, 1], [], []>} : vector<16x1920xbf16>, vector<1920x128xbf16>, vector<16x128xf32> -> vector<16x128xf32>
    %c0_3 = arith.constant 0 : index
    %c0_4 = arith.constant 0 : index
    %3 = vector.load %arg3[%c0_3, %c0_4] : memref<1x128xf32, #tpu.memory_space<vmem>>, vector<1x128xf32>
    %4 = vector.broadcast %3 : vector<1x128xf32> to vector<16x128xf32>
    %5 = arith.addf %2, %4 : vector<16x128xf32>
    %cst_5 = arith.constant 0.000000e+00 : f32
    %6 = vector.broadcast %cst_5 : f32 to vector<16x128xf32>
    %7 = arith.maximumf %5, %6 : vector<16x128xf32>
    %c0_6 = arith.constant 0 : index
    %c0_7 = arith.constant 0 : index
    %8 = vector.load %arg7[%c0_6, %c0_7] : memref<16x128xf32, #tpu.memory_space<vmem>>, vector<16x128xf32>
    tpu.vector_store %arg7[%c0_6, %c0_7], %7 {strides = array<i32>} : memref<16x128xf32, #tpu.memory_space<vmem>>, vector<16x128xf32>,
    %c0_8 = arith.constant 0 : index
    %c0_9 = arith.constant 0 : index
    %9 = vector.load %arg4[%c0_8, %c0_9] : memref<128x128xf32, #tpu.memory_space<vmem>>, vector<128x128xf32>
    %cst_10 = arith.constant dense<0.000000e+00> : vector<16x128xf32>
    %10 = tpu.matmul %7, %9, %cst_10 {dimension_numbers = #tpu.dot_dimension_numbers<[1], [0], [0], [1], [0, 0, 1, 1], [], []>} : vector<16x128xf32>, vector<128x128xf32>, vector<16x128xf32> -> vector<16x128xf32>
    %c0_11 = arith.constant 0 : index
    %c0_12 = arith.constant 0 : index
    %11 = vector.load %arg5[%c0_11, %c0_12] : memref<1x128xf32, #tpu.memory_space<vmem>>, vector<1x128xf32>
    %12 = vector.broadcast %11 : vector<1x128xf32> to vector<16x128xf32>
    %13 = arith.addf %10, %12 : vector<16x128xf32>
    %c0_13 = arith.constant 0 : index
    %c0_14 = arith.constant 0 : index
    %14 = vector.load %arg6[%c0_13, %c0_14] : memref<16x128xf32, #tpu.memory_space<vmem>>, vector<16x128xf32>
    tpu.vector_store %arg6[%c0_13, %c0_14], %13 {strides = array<i32>} : memref<16x128xf32, #tpu.memory_space<vmem>>, vector<16x128xf32>,
    return
  }
  func.func @transform_0(%arg0: i32) -> (i32, i32) {
    %c0_i32 = arith.constant 0 : i32
    %c0_i32_0 = arith.constant 0 : i32
    return %arg0, %c0_i32 : i32, i32
  }
  func.func @transform_1(%arg0: i32) -> (i32, i32) {
    %c0_i32 = arith.constant 0 : i32
    %c0_i32_0 = arith.constant 0 : i32
    %c0_i32_1 = arith.constant 0 : i32
    return %c0_i32, %c0_i32_0 : i32, i32
  }
  func.func @transform_2(%arg0: i32) -> (i32, i32) {
    %c0_i32 = arith.constant 0 : i32
    %c0_i32_0 = arith.constant 0 : i32
    %c0_i32_1 = arith.constant 0 : i32
    return %c0_i32, %c0_i32_0 : i32, i32
  }
  func.func @transform_3(%arg0: i32) -> (i32, i32) {
    %c0_i32 = arith.constant 0 : i32
    %c0_i32_0 = arith.constant 0 : i32
    %c0_i32_1 = arith.constant 0 : i32
    return %c0_i32, %c0_i32_0 : i32, i32
  }
  func.func @transform_4(%arg0: i32) -> (i32, i32) {
    %c0_i32 = arith.constant 0 : i32
    %c0_i32_0 = arith.constant 0 : i32
    %c0_i32_1 = arith.constant 0 : i32
    return %c0_i32, %c0_i32_0 : i32, i32
  }
  func.func @transform_5(%arg0: i32) -> (i32, i32) {
    %c0_i32 = arith.constant 0 : i32
    %c0_i32_0 = arith.constant 0 : i32
    return %arg0, %c0_i32 : i32, i32
  }
  func.func @transform_6(%arg0: i32) -> (i32, i32) {
    %c0_i32 = arith.constant 0 : i32
    %c0_i32_0 = arith.constant 0 : i32
    return %arg0, %c0_i32 : i32, i32
  }
}

</mosaic_0001>

<llo_original>
// kernel: dense_net_head.1
$region0: #{dense_net_head.1}
  #allocation0 [shape = 'u32[]', space=smem, size = 0x4, offset = 0x4, fixed_abs, tag = 'smem constant byte address 0x4 - core index']
  #allocation1 [shape = 'u32[72,128]{1,0:T(1,128)}', space=vmem, size = 0x9000, scoped, tag = 'internal scratch']
  %s0 = inlined_call_operand.vmem [shape: bf16[16,1920], index: 0, kind: input, shape index: {}]
  %s1 = inlined_call_operand.vmem [shape: bf16[1920,128], index: 1, kind: input, shape index: {}]
  %s2 = inlined_call_operand.vmem [shape: f32[1,128], index: 2, kind: input, shape index: {}]
  %s3 = inlined_call_operand.vmem [shape: f32[128,128], index: 3, kind: input, shape index: {}]
  %s4 = inlined_call_operand.vmem [shape: f32[1,128], index: 4, kind: input, shape index: {}]
  %s5 = inlined_call_operand.vmem [shape: f32[16,128], index: 5, kind: output, shape index: {0}]
  %s6 = inlined_call_operand.vmem [shape: f32[16,128], index: 6, kind: output, shape index: {1}]
  %7 = xla_tuple %s5, %s6
  %s8 = sld [smem:[#allocation0]]
  $region38: #{dense_net_head.1} parent=0
    _
  %s10 = ssub.s32 1, %s8
  %s11 = scalar_select 0, %s10, %s8
  // Predicated region
  $region2: #{dense_net_head.1} parent=0 // pred_check
    _
  $region3: #{dense_net_head.1} parent=0 // pred_check_branch
    %13 = sbr.rel (0) target = $region5
  $region4: #{dense_net_head.1} parent=0 // pred_region
    _
  $region5: #{dense_net_head.1} parent=0 // pred_fallthru
    _
  // Predicated region
  $region6: #{dense_net_head.1} parent=0 // pred_check
    _
  $region7: #{dense_net_head.1} parent=0 // pred_check_branch
    %15 = sbr.rel (0) target = $region9
  $region8: #{dense_net_head.1} parent=0 // pred_region
    _
  $region9: #{dense_net_head.1} parent=0 // pred_fallthru
    _
  // Predicated region
  $region10: #{dense_net_head.1} parent=0 // pred_check
    _
  $region11: #{dense_net_head.1} parent=0 // pred_check_branch
    %17 = sbr.rel (0) target = $region13
  $region12: #{dense_net_head.1} parent=0 // pred_region
    _
  $region13: #{dense_net_head.1} parent=0 // pred_fallthru
    _
  // Predicated region
  $region14: #{dense_net_head.1} parent=0 // pred_check
    _
  $region15: #{dense_net_head.1} parent=0 // pred_check_branch
    %19 = sbr.rel (0) target = $region17
  $region16: #{dense_net_head.1} parent=0 // pred_region
    _
  $region17: #{dense_net_head.1} parent=0 // pred_fallthru
    _
  // Predicated region
  $region18: #{dense_net_head.1} parent=0 // pred_check
    _
  $region19: #{dense_net_head.1} parent=0 // pred_check_branch
    %21 = sbr.rel (0) target = $region21
  $region20: #{dense_net_head.1} parent=0 // pred_region
    _
  $region21: #{dense_net_head.1} parent=0 // pred_fallthru
    _
  %v22 = vld [vmem:[%s0] sm:$0xff]
  %v23 = vld [vmem:[%s0 + $0x8] sm:$0xff]
  %v24 = vld [vmem:[%s0 + $0x10] sm:$0xff]
  %v25 = vld [vmem:[%s0 + $0x18] sm:$0xff]
  %v26 = vld [vmem:[%s0 + $0x20] sm:$0xff]
  %v27 = vld [vmem:[%s0 + $0x28] sm:$0xff]
  %v28 = vld [vmem:[%s0 + $0x30] sm:$0xff]
  %v29 = vld [vmem:[%s0 + $0x38] sm:$0xf]
  %v30 = vld [vmem:[%s0 + $0x3c] sm:$0xff]
  %v31 = vld [vmem:[%s0 + $0x44] sm:$0xff]
  %v32 = vld [vmem:[%s0 + $0x4c] sm:$0xff]
  %v33 = vld [vmem:[%s0 + $0x54] sm:$0xff]
  %v34 = vld [vmem:[%s0 + $0x5c] sm:$0xff]
  %v35 = vld [vmem:[%s0 + $0x64] sm:$0xff]
  %v36 = vld [vmem:[%s0 + $0x6c] sm:$0xff]
  %v37 = vld [vmem:[%s0 + $0x74] sm:$0xf]
  %v38 = vld [vmem:[%s1] sm:$0xf]
  %v39 = vld [vmem:[%s1 + $0x4] sm:$0xf]
  %v40 = vld [vmem:[%s1 + $0x8] sm:$0xf]
  %v41 = vld [vmem:[%s1 + $0xc] sm:$0xf]
  %v42 = vld [vmem:[%s1 + $0x10] sm:$0xf]
  %v43 = vld [vmem:[%s1 + $0x14] sm:$0xf]
  %v44 = vld [vmem:[%s1 + $0x18] sm:$0xf]
  %v45 = vld [vmem:[%s1 + $0x1c] sm:$0xf]
  %v46 = vld [vmem:[%s1 + $0x20] sm:$0xf]
  %v47 = vld [vmem:[%s1 + $0x24] sm:$0xf]
  %v48 = vld [vmem:[%s1 + $0x28] sm:$0xf]
  %v49 = vld [vmem:[%s1 + $0x2c] sm:$0xf]
  %v50 = vld [vmem:[%s1 + $0x30] sm:$0xf]
  %v51 = vld [vmem:[%s1 + $0x34] sm:$0xf]
  %v52 = vld [vmem:[%s1 + $0x38] sm:$0xf]
  %v53 = vld [vmem:[%s1 + $0x3c] sm:$0xf]
  %v54 = vld [vmem:[%s1 + $0x40] sm:$0xf]
  %v55 = vld [vmem:[%s1 + $0x44] sm:$0xf]
  %v56 = vld [vmem:[%s1 + $0x48] sm:$0xf]
  %v57 = vld [vmem:[%s1 + $0x4c] sm:$0xf]
  %v58 = vld [vmem:[%s1 + $0x50] sm:$0xf]
  %v59 = vld [vmem:[%s1 + $0x54] sm:$0xf]
  %v60 = vld [vmem:[%s1 + $0x58] sm:$0xf]
  %v61 = vld [vmem:[%s1 + $0x5c] sm:$0xf]
  %v62 = vld [vmem:[%s1 + $0x60] sm:$0xf]
  %v63 = vld [vmem:[%s1 + $0x64] sm:$0xf]
  %v64 = vld [vmem:[%s1 + $0x68] sm:$0xf]
  %v65 = vld [vmem:[%s1 + $0x6c] sm:$0xf]
  %v66 = vld [vmem:[%s1 + $0x70] sm:$0xf]
  %v67 = vld [vmem:[%s1 + $0x74] sm:$0xf]
  %v68 = vld [vmem:[%s1 + $0x78] sm:$0xf]
  %v69 = vld [vmem:[%s1 + $0x7c] sm:$0xf]
  %v70 = vld [vmem:[%s1 + $0x80] sm:$0xf]
  %v71 = vld [vmem:[%s1 + $0x84] sm:$0xf]
  %v72 = vld [vmem:[%s1 + $0x88] sm:$0xf]
  %v73 = vld [vmem:[%s1 + $0x8c] sm:$0xf]
  %v74 = vld [vmem:[%s1 + $0x90] sm:$0xf]
  %v75 = vld [vmem:[%s1 + $0x94] sm:$0xf]
  %v76 = vld [vmem:[%s1 + $0x98] sm:$0xf]
  %v77 = vld [vmem:[%s1 + $0x9c] sm:$0xf]
  %v78 = vld [vmem:[%s1 + $0xa0] sm:$0xf]
  %v79 = vld [vmem:[%s1 + $0xa4] sm:$0xf]
  %v80 = vld [vmem:[%s1 + $0xa8] sm:$0xf]
  %v81 = vld [vmem:[%s1 + $0xac] sm:$0xf]
  %v82 = vld [vmem:[%s1 + $0xb0] sm:$0xf]
  %v83 = vld [vmem:[%s1 + $0xb4] sm:$0xf]
  %v84 = vld [vmem:[%s1 + $0xb8] sm:$0xf]
  %v85 = vld [vmem:[%s1 + $0xbc] sm:$0xf]
  %v86 = vld [vmem:[%s1 + $0xc0] sm:$0xf]
  %v87 = vld [vmem:[%s1 + $0xc4] sm:$0xf]
  %v88 = vld [vmem:[%s1 + $0xc8] sm:$0xf]
  %v89 = vld [vmem:[%s1 + $0xcc] sm:$0xf]
  %v90 = vld [vmem:[%s1 + $0xd0] sm:$0xf]
  %v91 = vld [vmem:[%s1 + $0xd4] sm:$0xf]
  %v92 = vld [vmem:[%s1 + $0xd8] sm:$0xf]
  %v93 = vld [vmem:[%s1 + $0xdc] sm:$0xf]
  %v94 = vld [vmem:[%s1 + $0xe0] sm:$0xf]
  %v95 = vld [vmem:[%s1 + $0xe4] sm:$0xf]
  %v96 = vld [vmem:[%s1 + $0xe8] sm:$0xf]
  %v97 = vld [vmem:[%s1 + $0xec] sm:$0xf]
  %v98 = vld [vmem:[%s1 + $0xf0] sm:$0xf]
  %v99 = vld [vmem:[%s1 + $0xf4] sm:$0xf]
  %v100 = vld [vmem:[%s1 + $0xf8] sm:$0xf]
  %v101 = vld [vmem:[%s1 + $0xfc] sm:$0xf]
  %v102 = vld [vmem:[%s1 + $0x100] sm:$0xf]
  %v103 = vld [vmem:[%s1 + $0x104] sm:$0xf]
  %v104 = vld [vmem:[%s1 + $0x108] sm:$0xf]
  %v105 = vld [vmem:[%s1 + $0x10c] sm:$0xf]
  %v106 = vld [vmem:[%s1 + $0x110] sm:$0xf]
  %v107 = vld [vmem:[%s1 + $0x114] sm:$0xf]
  %v108 = vld [vmem:[%s1 + $0x118] sm:$0xf]
  %v109 = vld [vmem:[%s1 + $0x11c] sm:$0xf]
  %v110 = vld [vmem:[%s1 + $0x120] sm:$0xf]
  %v111 = vld [vmem:[%s1 + $0x124] sm:$0xf]
  %v112 = vld [vmem:[%s1 + $0x128] sm:$0xf]
  %v113 = vld [vmem:[%s1 + $0x12c] sm:$0xf]
  %v114 = vld [vmem:[%s1 + $0x130] sm:$0xf]
  %v115 = vld [vmem:[%s1 + $0x134] sm:$0xf]
  %v116 = vld [vmem:[%s1 + $0x138] sm:$0xf]
  %v117 = vld [vmem:[%s1 + $0x13c] sm:$0xf]
  %v118 = vld [vmem:[%s1 + $0x140] sm:$0xf]
  %v119 = vld [vmem:[%s1 + $0x144] sm:$0xf]
  %v120 = vld [vmem:[%s1 + $0x148] sm:$0xf]
  %v121 = vld [vmem:[%s1 + $0x14c] sm:$0xf]
  %v122 = vld [vmem:[%s1 + $0x150] sm:$0xf]
  %v123 = vld [vmem:[%s1 + $0x154] sm:$0xf]
  %v124 = vld [vmem:[%s1 + $0x158] sm:$0xf]
  %v125 = vld [vmem:[%s1 + $0x15c] sm:$0xf]
  %v126 = vld [vmem:[%s1 + $0x160] sm:$0xf]
  %v127 = vld [vmem:[%s1 + $0x164] sm:$0xf]
  %v128 = vld [vmem:[%s1 + $0x168] sm:$0xf]
  %v129 = vld [vmem:[%s1 + $0x16c] sm:$0xf]
  %v130 = vld [vmem:[%s1 + $0x170] sm:$0xf]
  %v131 = vld [vmem:[%s1 + $0x174] sm:$0xf]
  %v132 = vld [vmem:[%s1 + $0x178] sm:$0xf]
  %v133 = vld [vmem:[%s1 + $0x17c] sm:$0xf]
  %v134 = vld [vmem:[%s1 + $0x180] sm:$0xf]
  %v135 = vld [vmem:[%s1 + $0x184] sm:$0xf]
  %v136 = vld [vmem:[%s1 + $0x188] sm:$0xf]
  %v137 = vld [vmem:[%s1 + $0x18c] sm:$0xf]
  %v138 = vld [vmem:[%s1 + $0x190] sm:$0xf]
  %v139 = vld [vmem:[%s1 + $0x194] sm:$0xf]
  %v140 = vld [vmem:[%s1 + $0x198] sm:$0xf]
  %v141 = vld [vmem:[%s1 + $0x19c] sm:$0xf]
  %v142 = vld [vmem:[%s1 + $0x1a0] sm:$0xf]
  %v143 = vld [vmem:[%s1 + $0x1a4] sm:$0xf]
  %v144 = vld [vmem:[%s1 + $0x1a8] sm:$0xf]
  %v145 = vld [vmem:[%s1 + $0x1ac] sm:$0xf]
  %v146 = vld [vmem:[%s1 + $0x1b0] sm:$0xf]
  %v147 = vld [vmem:[%s1 + $0x1b4] sm:$0xf]
  %v148 = vld [vmem:[%s1 + $0x1b8] sm:$0xf]
  %v149 = vld [vmem:[%s1 + $0x1bc] sm:$0xf]
  %v150 = vld [vmem:[%s1 + $0x1c0] sm:$0xf]
  %v151 = vld [vmem:[%s1 + $0x1c4] sm:$0xf]
  %v152 = vld [vmem:[%s1 + $0x1c8] sm:$0xf]
  %v153 = vld [vmem:[%s1 + $0x1cc] sm:$0xf]
  %v154 = vld [vmem:[%s1 + $0x1d0] sm:$0xf]
  %v155 = vld [vmem:[%s1 + $0x1d4] sm:$0xf]
  %v156 = vld [vmem:[%s1 + $0x1d8] sm:$0xf]
  %v157 = vld [vmem:[%s1 + $0x1dc] sm:$0xf]
  %v158 = vld [vmem:[%s1 + $0x1e0] sm:$0xf]
  %v159 = vld [vmem:[%s1 + $0x1e4] sm:$0xf]
  %v160 = vld [vmem:[%s1 + $0x1e8] sm:$0xf]
  %v161 = vld [vmem:[%s1 + $0x1ec] sm:$0xf]
  %v162 = vld [vmem:[%s1 + $0x1f0] sm:$0xf]
  %v163 = vld [vmem:[%s1 + $0x1f4] sm:$0xf]
  %v164 = vld [vmem:[%s1 + $0x1f8] sm:$0xf]
  %v165 = vld [vmem:[%s1 + $0x1fc] sm:$0xf]
  %v166 = vld [vmem:[%s1 + $0x200] sm:$0xf]
  %v167 = vld [vmem:[%s1 + $0x204] sm:$0xf]
  %v168 = vld [vmem:[%s1 + $0x208] sm:$0xf]
  %v169 = vld [vmem:[%s1 + $0x20c] sm:$0xf]
  %v170 = vld [vmem:[%s1 + $0x210] sm:$0xf]
  %v171 = vld [vmem:[%s1 + $0x214] sm:$0xf]
  %v172 = vld [vmem:[%s1 + $0x218] sm:$0xf]
  %v173 = vld [vmem:[%s1 + $0x21c] sm:$0xf]
  %v174 = vld [vmem:[%s1 + $0x220] sm:$0xf]
  %v175 = vld [vmem:[%s1 + $0x224] sm:$0xf]
  %v176 = vld [vmem:[%s1 + $0x228] sm:$0xf]
  %v177 = vld [vmem:[%s1 + $0x22c] sm:$0xf]
  %v178 = vld [vmem:[%s1 + $0x230] sm:$0xf]
  %v179 = vld [vmem:[%s1 + $0x234] sm:$0xf]
  %v180 = vld [vmem:[%s1 + $0x238] sm:$0xf]
  %v181 = vld [vmem:[%s1 + $0x23c] sm:$0xf]
  %v182 = vld [vmem:[%s1 + $0x240] sm:$0xf]
  %v183 = vld [vmem:[%s1 + $0x244] sm:$0xf]
  %v184 = vld [vmem:[%s1 + $0x248] sm:$0xf]
  %v185 = vld [vmem:[%s1 + $0x24c] sm:$0xf]
  %v186 = vld [vmem:[%s1 + $0x250] sm:$0xf]
  %v187 = vld [vmem:[%s1 + $0x254] sm:$0xf]
  %v188 = vld [vmem:[%s1 + $0x258] sm:$0xf]
  %v189 = vld [vmem:[%s1 + $0x25c] sm:$0xf]
  %v190 = vld [vmem:[%s1 + $0x260] sm:$0xf]
  %v191 = vld [vmem:[%s1 + $0x264] sm:$0xf]
  %v192 = vld [vmem:[%s1 + $0x268] sm:$0xf]
  %v193 = vld [vmem:[%s1 + $0x26c] sm:$0xf]
  %v194 = vld [vmem:[%s1 + $0x270] sm:$0xf]
  %v195 = vld [vmem:[%s1 + $0x274] sm:$0xf]
  %v196 = vld [vmem:[%s1 + $0x278] sm:$0xf]
  %v197 = vld [vmem:[%s1 + $0x27c] sm:$0xf]
  %v198 = vld [vmem:[%s1 + $0x280] sm:$0xf]
  %v199 = vld [vmem:[%s1 + $0x284] sm:$0xf]
  %v200 = vld [vmem:[%s1 + $0x288] sm:$0xf]
  %v201 = vld [vmem:[%s1 + $0x28c] sm:$0xf]
  %v202 = vld [vmem:[%s1 + $0x290] sm:$0xf]
  %v203 = vld [vmem:[%s1 + $0x294] sm:$0xf]
  %v204 = vld [vmem:[%s1 + $0x298] sm:$0xf]
  %v205 = vld [vmem:[%s1 + $0x29c] sm:$0xf]
  %v206 = vld [vmem:[%s1 + $0x2a0] sm:$0xf]
  %v207 = vld [vmem:[%s1 + $0x2a4] sm:$0xf]
  %v208 = vld [vmem:[%s1 + $0x2a8] sm:$0xf]
  %v209 = vld [vmem:[%s1 + $0x2ac] sm:$0xf]
  %v210 = vld [vmem:[%s1 + $0x2b0] sm:$0xf]
  %v211 = vld [vmem:[%s1 + $0x2b4] sm:$0xf]
  %v212 = vld [vmem:[%s1 + $0x2b8] sm:$0xf]
  %v213 = vld [vmem:[%s1 + $0x2bc] sm:$0xf]
  %v214 = vld [vmem:[%s1 + $0x2c0] sm:$0xf]
  %v215 = vld [vmem:[%s1 + $0x2c4] sm:$0xf]
  %v216 = vld [vmem:[%s1 + $0x2c8] sm:$0xf]
  %v217 = vld [vmem:[%s1 + $0x2cc] sm:$0xf]
  %v218 = vld [vmem:[%s1 + $0x2d0] sm:$0xf]
  %v219 = vld [vmem:[%s1 + $0x2d4] sm:$0xf]
  %v220 = vld [vmem:[%s1 + $0x2d8] sm:$0xf]
  %v221 = vld [vmem:[%s1 + $0x2dc] sm:$0xf]
  %v222 = vld [vmem:[%s1 + $0x2e0] sm:$0xf]
  %v223 = vld [vmem:[%s1 + $0x2e4] sm:$0xf]
  %v224 = vld [vmem:[%s1 + $0x2e8] sm:$0xf]
  %v225 = vld [vmem:[%s1 + $0x2ec] sm:$0xf]
  %v226 = vld [vmem:[%s1 + $0x2f0] sm:$0xf]
  %v227 = vld [vmem:[%s1 + $0x2f4] sm:$0xf]
  %v228 = vld [vmem:[%s1 + $0x2f8] sm:$0xf]
  %v229 = vld [vmem:[%s1 + $0x2fc] sm:$0xf]
  %v230 = vld [vmem:[%s1 + $0x300] sm:$0xf]
  %v231 = vld [vmem:[%s1 + $0x304] sm:$0xf]
  %v232 = vld [vmem:[%s1 + $0x308] sm:$0xf]
  %v233 = vld [vmem:[%s1 + $0x30c] sm:$0xf]
  %v234 = vld [vmem:[%s1 + $0x310] sm:$0xf]
  %v235 = vld [vmem:[%s1 + $0x314] sm:$0xf]
  %v236 = vld [vmem:[%s1 + $0x318] sm:$0xf]
  %v237 = vld [vmem:[%s1 + $0x31c] sm:$0xf]
  %v238 = vld [vmem:[%s1 + $0x320] sm:$0xf]
  %v239 = vld [vmem:[%s1 + $0x324] sm:$0xf]
  %v240 = vld [vmem:[%s1 + $0x328] sm:$0xf]
  %v241 = vld [vmem:[%s1 + $0x32c] sm:$0xf]
  %v242 = vld [vmem:[%s1 + $0x330] sm:$0xf]
  %v243 = vld [vmem:[%s1 + $0x334] sm:$0xf]
  %v244 = vld [vmem:[%s1 + $0x338] sm:$0xf]
  %v245 = vld [vmem:[%s1 + $0x33c] sm:$0xf]
  %v246 = vld [vmem:[%s1 + $0x340] sm:$0xf]
  %v247 = vld [vmem:[%s1 + $0x344] sm:$0xf]
  %v248 = vld [vmem:[%s1 + $0x348] sm:$0xf]
  %v249 = vld [vmem:[%s1 + $0x34c] sm:$0xf]
  %v250 = vld [vmem:[%s1 + $0x350] sm:$0xf]
  %v251 = vld [vmem:[%s1 + $0x354] sm:$0xf]
  %v252 = vld [vmem:[%s1 + $0x358] sm:$0xf]
  %v253 = vld [vmem:[%s1 + $0x35c] sm:$0xf]
  %v254 = vld [vmem:[%s1 + $0x360] sm:$0xf]
  %v255 = vld [vmem:[%s1 + $0x364] sm:$0xf]
  %v256 = vld [vmem:[%s1 + $0x368] sm:$0xf]
  %v257 = vld [vmem:[%s1 + $0x36c] sm:$0xf]
  %v258 = vld [vmem:[%s1 + $0x370] sm:$0xf]
  %v259 = vld [vmem:[%s1 + $0x374] sm:$0xf]
  %v260 = vld [vmem:[%s1 + $0x378] sm:$0xf]
  %v261 = vld [vmem:[%s1 + $0x37c] sm:$0xf]
  %v262 = vld [vmem:[%s1 + $0x380] sm:$0xf]
  %v263 = vld [vmem:[%s1 + $0x384] sm:$0xf]
  %v264 = vld [vmem:[%s1 + $0x388] sm:$0xf]
  %v265 = vld [vmem:[%s1 + $0x38c] sm:$0xf]
  %v266 = vld [vmem:[%s1 + $0x390] sm:$0xf]
  %v267 = vld [vmem:[%s1 + $0x394] sm:$0xf]
  %v268 = vld [vmem:[%s1 + $0x398] sm:$0xf]
  %v269 = vld [vmem:[%s1 + $0x39c] sm:$0xf]
  %v270 = vld [vmem:[%s1 + $0x3a0] sm:$0xf]
  %v271 = vld [vmem:[%s1 + $0x3a4] sm:$0xf]
  %v272 = vld [vmem:[%s1 + $0x3a8] sm:$0xf]
  %v273 = vld [vmem:[%s1 + $0x3ac] sm:$0xf]
  %v274 = vld [vmem:[%s1 + $0x3b0] sm:$0xf]
  %v275 = vld [vmem:[%s1 + $0x3b4] sm:$0xf]
  %v276 = vld [vmem:[%s1 + $0x3b8] sm:$0xf]
  %v277 = vld [vmem:[%s1 + $0x3bc] sm:$0xf]
  %v278 = vld [vmem:[%s2] sm:$0x1]
  %v280 = vperm.slane %v278, 0
  %v298 = vunpack.c.l.b16 %v22
  %v299 = vunpack.c.h.b16 %v22
  %v300 = vunpack.c.l.b16 %v23
  %v301 = vunpack.c.h.b16 %v23
  %v302 = vunpack.c.l.b16 %v24
  %v303 = vunpack.c.h.b16 %v24
  %v304 = vunpack.c.l.b16 %v25
  %v305 = vunpack.c.h.b16 %v25
  %v306 = vunpack.c.l.b16 %v26
  %v307 = vunpack.c.h.b16 %v26
  %v308 = vunpack.c.l.b16 %v27
  %v309 = vunpack.c.h.b16 %v27
  %v310 = vunpack.c.l.b16 %v28
  %v311 = vunpack.c.h.b16 %v28
  %v312 = vunpack.c.l.b16 %v29
  %v313 = vunpack.c.l.b16 %v30
  %v314 = vunpack.c.h.b16 %v30
  %v315 = vunpack.c.l.b16 %v31
  %v316 = vunpack.c.h.b16 %v31
  %v317 = vunpack.c.l.b16 %v32
  %v318 = vunpack.c.h.b16 %v32
  %v319 = vunpack.c.l.b16 %v33
  %v320 = vunpack.c.h.b16 %v33
  %v321 = vunpack.c.l.b16 %v34
  %v322 = vunpack.c.h.b16 %v34
  %v323 = vunpack.c.l.b16 %v35
  %v324 = vunpack.c.h.b16 %v35
  %v325 = vunpack.c.l.b16 %v36
  %v326 = vunpack.c.h.b16 %v36
  %v327 = vunpack.c.l.b16 %v37
  %v328 = vpack.c.b16 %v313, %v298
  %v329 = vpack.c.b16 %v314, %v299
  %v330 = vpack.c.b16 %v315, %v300
  %v331 = vpack.c.b16 %v316, %v301
  %v332 = vpack.c.b16 %v317, %v302
  %v333 = vpack.c.b16 %v318, %v303
  %v334 = vpack.c.b16 %v319, %v304
  %v335 = vpack.c.b16 %v320, %v305
  %v336 = vpack.c.b16 %v321, %v306
  %v337 = vpack.c.b16 %v322, %v307
  %v338 = vpack.c.b16 %v323, %v308
  %v339 = vpack.c.b16 %v324, %v309
  %v340 = vpack.c.b16 %v325, %v310
  %v341 = vpack.c.b16 %v326, %v311
  %v342 = vpack.c.b16 %v327, %v312
  %v598 = vunpack.c.l.b16 %v38
  %v599 = vunpack.c.l.b16 %v39
  %v600 = vunpack.c.l.b16 %v40
  %v601 = vunpack.c.l.b16 %v41
  %v602 = vunpack.c.l.b16 %v42
  %v603 = vunpack.c.l.b16 %v43
  %v604 = vunpack.c.l.b16 %v44
  %v605 = vunpack.c.l.b16 %v45
  %v606 = vunpack.c.l.b16 %v46
  %v607 = vunpack.c.l.b16 %v47
  %v608 = vunpack.c.l.b16 %v48
  %v609 = vunpack.c.l.b16 %v49
  %v610 = vunpack.c.l.b16 %v50
  %v611 = vunpack.c.l.b16 %v51
  %v612 = vunpack.c.l.b16 %v52
  %v613 = vunpack.c.l.b16 %v53
  %v614 = vunpack.c.l.b16 %v54
  %v615 = vunpack.c.l.b16 %v55
  %v616 = vunpack.c.l.b16 %v56
  %v617 = vunpack.c.l.b16 %v57
  %v618 = vunpack.c.l.b16 %v58
  %v619 = vunpack.c.l.b16 %v59
  %v620 = vunpack.c.l.b16 %v60
  %v621 = vunpack.c.l.b16 %v61
  %v622 = vunpack.c.l.b16 %v62
  %v623 = vunpack.c.l.b16 %v63
  %v624 = vunpack.c.l.b16 %v64
  %v625 = vunpack.c.l.b16 %v65
  %v626 = vunpack.c.l.b16 %v66
  %v627 = vunpack.c.l.b16 %v67
  %v628 = vunpack.c.l.b16 %v68
  %v629 = vunpack.c.l.b16 %v69
  %v630 = vunpack.c.l.b16 %v70
  %v631 = vunpack.c.l.b16 %v71
  %v632 = vunpack.c.l.b16 %v72
  %v633 = vunpack.c.l.b16 %v73
  %v634 = vunpack.c.l.b16 %v74
  %v635 = vunpack.c.l.b16 %v75
  %v636 = vunpack.c.l.b16 %v76
  %v637 = vunpack.c.l.b16 %v77
  %v638 = vunpack.c.l.b16 %v78
  %v639 = vunpack.c.l.b16 %v79
  %v640 = vunpack.c.l.b16 %v80
  %v641 = vunpack.c.l.b16 %v81
  %v642 = vunpack.c.l.b16 %v82
  %v643 = vunpack.c.l.b16 %v83
  %v644 = vunpack.c.l.b16 %v84
  %v645 = vunpack.c.l.b16 %v85
  %v646 = vunpack.c.l.b16 %v86
  %v647 = vunpack.c.l.b16 %v87
  %v648 = vunpack.c.l.b16 %v88
  %v649 = vunpack.c.l.b16 %v89
  %v650 = vunpack.c.l.b16 %v90
  %v651 = vunpack.c.l.b16 %v91
  %v652 = vunpack.c.l.b16 %v92
  %v653 = vunpack.c.l.b16 %v93
  %v654 = vunpack.c.l.b16 %v94
  %v655 = vunpack.c.l.b16 %v95
  %v656 = vunpack.c.l.b16 %v96
  %v657 = vunpack.c.l.b16 %v97
  %v658 = vunpack.c.l.b16 %v98
  %v659 = vunpack.c.l.b16 %v99
  %v660 = vunpack.c.l.b16 %v100
  %v661 = vunpack.c.l.b16 %v101
  %v662 = vunpack.c.l.b16 %v102
  %v663 = vunpack.c.l.b16 %v103
  %v664 = vunpack.c.l.b16 %v104
  %v665 = vunpack.c.l.b16 %v105
  %v666 = vunpack.c.l.b16 %v106
  %v667 = vunpack.c.l.b16 %v107
  %v668 = vunpack.c.l.b16 %v108
  %v669 = vunpack.c.l.b16 %v109
  %v670 = vunpack.c.l.b16 %v110
  %v671 = vunpack.c.l.b16 %v111
  %v672 = vunpack.c.l.b16 %v112
  %v673 = vunpack.c.l.b16 %v113
  %v674 = vunpack.c.l.b16 %v114
  %v675 = vunpack.c.l.b16 %v115
  %v676 = vunpack.c.l.b16 %v116
  %v677 = vunpack.c.l.b16 %v117
  %v678 = vunpack.c.l.b16 %v118
  %v679 = vunpack.c.l.b16 %v119
  %v680 = vunpack.c.l.b16 %v120
  %v681 = vunpack.c.l.b16 %v121
  %v682 = vunpack.c.l.b16 %v122
  %v683 = vunpack.c.l.b16 %v123
  %v684 = vunpack.c.l.b16 %v124
  %v685 = vunpack.c.l.b16 %v125
  %v686 = vunpack.c.l.b16 %v126
  %v687 = vunpack.c.l.b16 %v127
  %v688 = vunpack.c.l.b16 %v128
  %v689 = vunpack.c.l.b16 %v129
  %v690 = vunpack.c.l.b16 %v130
  %v691 = vunpack.c.l.b16 %v131
  %v692 = vunpack.c.l.b16 %v132
  %v693 = vunpack.c.l.b16 %v133
  %v694 = vunpack.c.l.b16 %v134
  %v695 = vunpack.c.l.b16 %v135
  %v696 = vunpack.c.l.b16 %v136
  %v697 = vunpack.c.l.b16 %v137
  %v698 = vunpack.c.l.b16 %v138
  %v699 = vunpack.c.l.b16 %v139
  %v700 = vunpack.c.l.b16 %v140
  %v701 = vunpack.c.l.b16 %v141
  %v702 = vunpack.c.l.b16 %v142
  %v703 = vunpack.c.l.b16 %v143
  %v704 = vunpack.c.l.b16 %v144
  %v705 = vunpack.c.l.b16 %v145
  %v706 = vunpack.c.l.b16 %v146
  %v707 = vunpack.c.l.b16 %v147
  %v708 = vunpack.c.l.b16 %v148
  %v709 = vunpack.c.l.b16 %v149
  %v710 = vunpack.c.l.b16 %v150
  %v711 = vunpack.c.l.b16 %v151
  %v712 = vunpack.c.l.b16 %v152
  %v713 = vunpack.c.l.b16 %v153
  %v714 = vunpack.c.l.b16 %v154
  %v715 = vunpack.c.l.b16 %v155
  %v716 = vunpack.c.l.b16 %v156
  %v717 = vunpack.c.l.b16 %v157
  %v718 = vunpack.c.l.b16 %v158
  %v719 = vunpack.c.l.b16 %v159
  %v720 = vunpack.c.l.b16 %v160
  %v721 = vunpack.c.l.b16 %v161
  %v722 = vunpack.c.l.b16 %v162
  %v723 = vunpack.c.l.b16 %v163
  %v724 = vunpack.c.l.b16 %v164
  %v725 = vunpack.c.l.b16 %v165
  %v726 = vunpack.c.l.b16 %v166
  %v727 = vunpack.c.l.b16 %v167
  %v728 = vunpack.c.l.b16 %v168
  %v729 = vunpack.c.l.b16 %v169
  %v730 = vunpack.c.l.b16 %v170
  %v731 = vunpack.c.l.b16 %v171
  %v732 = vunpack.c.l.b16 %v172
  %v733 = vunpack.c.l.b16 %v173
  %v734 = vunpack.c.l.b16 %v174
  %v735 = vunpack.c.l.b16 %v175
  %v736 = vunpack.c.l.b16 %v176
  %v737 = vunpack.c.l.b16 %v177
  %v738 = vunpack.c.l.b16 %v178
  %v739 = vunpack.c.l.b16 %v179
  %v740 = vunpack.c.l.b16 %v180
  %v741 = vunpack.c.l.b16 %v181
  %v742 = vunpack.c.l.b16 %v182
  %v743 = vunpack.c.l.b16 %v183
  %v744 = vunpack.c.l.b16 %v184
  %v745 = vunpack.c.l.b16 %v185
  %v746 = vunpack.c.l.b16 %v186
  %v747 = vunpack.c.l.b16 %v187
  %v748 = vunpack.c.l.b16 %v188
  %v749 = vunpack.c.l.b16 %v189
  %v750 = vunpack.c.l.b16 %v190
  %v751 = vunpack.c.l.b16 %v191
  %v752 = vunpack.c.l.b16 %v192
  %v753 = vunpack.c.l.b16 %v193
  %v754 = vunpack.c.l.b16 %v194
  %v755 = vunpack.c.l.b16 %v195
  %v756 = vunpack.c.l.b16 %v196
  %v757 = vunpack.c.l.b16 %v197
  %v758 = vunpack.c.l.b16 %v198
  %v759 = vunpack.c.l.b16 %v199
  %v760 = vunpack.c.l.b16 %v200
  %v761 = vunpack.c.l.b16 %v201
  %v762 = vunpack.c.l.b16 %v202
  %v763 = vunpack.c.l.b16 %v203
  %v764 = vunpack.c.l.b16 %v204
  %v765 = vunpack.c.l.b16 %v205
  %v766 = vunpack.c.l.b16 %v206
  %v767 = vunpack.c.l.b16 %v207
  %v768 = vunpack.c.l.b16 %v208
  %v769 = vunpack.c.l.b16 %v209
  %v770 = vunpack.c.l.b16 %v210
  %v771 = vunpack.c.l.b16 %v211
  %v772 = vunpack.c.l.b16 %v212
  %v773 = vunpack.c.l.b16 %v213
  %v774 = vunpack.c.l.b16 %v214
  %v775 = vunpack.c.l.b16 %v215
  %v776 = vunpack.c.l.b16 %v216
  %v777 = vunpack.c.l.b16 %v217
  %v778 = vunpack.c.l.b16 %v218
  %v779 = vunpack.c.l.b16 %v219
  %v780 = vunpack.c.l.b16 %v220
  %v781 = vunpack.c.l.b16 %v221
  %v782 = vunpack.c.l.b16 %v222
  %v783 = vunpack.c.l.b16 %v223
  %v784 = vunpack.c.l.b16 %v224
  %v785 = vunpack.c.l.b16 %v225
  %v786 = vunpack.c.l.b16 %v226
  %v787 = vunpack.c.l.b16 %v227
  %v788 = vunpack.c.l.b16 %v228
  %v789 = vunpack.c.l.b16 %v229
  %v790 = vunpack.c.l.b16 %v230
  %v791 = vunpack.c.l.b16 %v231
  %v792 = vunpack.c.l.b16 %v232
  %v793 = vunpack.c.l.b16 %v233
  %v794 = vunpack.c.l.b16 %v234
  %v795 = vunpack.c.l.b16 %v235
  %v796 = vunpack.c.l.b16 %v236
  %v797 = vunpack.c.l.b16 %v237
  %v798 = vunpack.c.l.b16 %v238
  %v799 = vunpack.c.l.b16 %v239
  %v800 = vunpack.c.l.b16 %v240
  %v801 = vunpack.c.l.b16 %v241
  %v802 = vunpack.c.l.b16 %v242
  %v803 = vunpack.c.l.b16 %v243
  %v804 = vunpack.c.l.b16 %v244
  %v805 = vunpack.c.l.b16 %v245
  %v806 = vunpack.c.l.b16 %v246
  %v807 = vunpack.c.l.b16 %v247
  %v808 = vunpack.c.l.b16 %v248
  %v809 = vunpack.c.l.b16 %v249
  %v810 = vunpack.c.l.b16 %v250
  %v811 = vunpack.c.l.b16 %v251
  %v812 = vunpack.c.l.b16 %v252
  %v813 = vunpack.c.l.b16 %v253
  %v814 = vunpack.c.l.b16 %v254
  %v815 = vunpack.c.l.b16 %v255
  %v816 = vunpack.c.l.b16 %v256
  %v817 = vunpack.c.l.b16 %v257
  %v818 = vunpack.c.l.b16 %v258
  %v819 = vunpack.c.l.b16 %v259
  %v820 = vunpack.c.l.b16 %v260
  %v821 = vunpack.c.l.b16 %v261
  %v822 = vunpack.c.l.b16 %v262
  %v823 = vunpack.c.l.b16 %v263
  %v824 = vunpack.c.l.b16 %v264
  %v825 = vunpack.c.l.b16 %v265
  %v826 = vunpack.c.l.b16 %v266
  %v827 = vunpack.c.l.b16 %v267
  %v828 = vunpack.c.l.b16 %v268
  %v829 = vunpack.c.l.b16 %v269
  %v830 = vunpack.c.l.b16 %v270
  %v831 = vunpack.c.l.b16 %v271
  %v832 = vunpack.c.l.b16 %v272
  %v833 = vunpack.c.l.b16 %v273
  %v834 = vunpack.c.l.b16 %v274
  %v835 = vunpack.c.l.b16 %v275
  %v836 = vunpack.c.l.b16 %v276
  %v837 = vunpack.c.l.b16 %v277
  %v838 = vpack.c.b16 %v599, %v598
  %v839 = vpack.c.b16 %v601, %v600
  %v840 = vpack.c.b16 %v603, %v602
  %v841 = vpack.c.b16 %v605, %v604
  %v842 = vpack.c.b16 %v607, %v606
  %v843 = vpack.c.b16 %v609, %v608
  %v844 = vpack.c.b16 %v611, %v610
  %v845 = vpack.c.b16 %v613, %v612
  %v846 = vpack.c.b16 %v615, %v614
  %v847 = vpack.c.b16 %v617, %v616
  %v848 = vpack.c.b16 %v619, %v618
  %v849 = vpack.c.b16 %v621, %v620
  %v850 = vpack.c.b16 %v623, %v622
  %v851 = vpack.c.b16 %v625, %v624
  %v852 = vpack.c.b16 %v627, %v626
  %v853 = vpack.c.b16 %v629, %v628
  %v854 = vpack.c.b16 %v631, %v630
  %v855 = vpack.c.b16 %v633, %v632
  %v856 = vpack.c.b16 %v635, %v634
  %v857 = vpack.c.b16 %v637, %v636
  %v858 = vpack.c.b16 %v639, %v638
  %v859 = vpack.c.b16 %v641, %v640
  %v860 = vpack.c.b16 %v643, %v642
  %v861 = vpack.c.b16 %v645, %v644
  %v862 = vpack.c.b16 %v647, %v646
  %v863 = vpack.c.b16 %v649, %v648
  %v864 = vpack.c.b16 %v651, %v650
  %v865 = vpack.c.b16 %v653, %v652
  %v866 = vpack.c.b16 %v655, %v654
  %v867 = vpack.c.b16 %v657, %v656
  %v868 = vpack.c.b16 %v659, %v658
  %v869 = vpack.c.b16 %v661, %v660
  %v870 = vpack.c.b16 %v663, %v662
  %v871 = vpack.c.b16 %v665, %v664
  %v872 = vpack.c.b16 %v667, %v666
  %v873 = vpack.c.b16 %v669, %v668
  %v874 = vpack.c.b16 %v671, %v670
  %v875 = vpack.c.b16 %v673, %v672
  %v876 = vpack.c.b16 %v675, %v674
  %v877 = vpack.c.b16 %v677, %v676
  %v878 = vpack.c.b16 %v679, %v678
  %v879 = vpack.c.b16 %v681, %v680
  %v880 = vpack.c.b16 %v683, %v682
  %v881 = vpack.c.b16 %v685, %v684
  %v882 = vpack.c.b16 %v687, %v686
  %v883 = vpack.c.b16 %v689, %v688
  %v884 = vpack.c.b16 %v691, %v690
  %v885 = vpack.c.b16 %v693, %v692
  %v886 = vpack.c.b16 %v695, %v694
  %v887 = vpack.c.b16 %v697, %v696
  %v888 = vpack.c.b16 %v699, %v698
  %v889 = vpack.c.b16 %v701, %v700
  %v890 = vpack.c.b16 %v703, %v702
  %v891 = vpack.c.b16 %v705, %v704
  %v892 = vpack.c.b16 %v707, %v706
  %v893 = vpack.c.b16 %v709, %v708
  %v894 = vpack.c.b16 %v711, %v710
  %v895 = vpack.c.b16 %v713, %v712
  %v896 = vpack.c.b16 %v715, %v714
  %v897 = vpack.c.b16 %v717, %v716
  %v898 = vpack.c.b16 %v719, %v718
  %v899 = vpack.c.b16 %v721, %v720
  %v900 = vpack.c.b16 %v723, %v722
  %v901 = vpack.c.b16 %v725, %v724
  %v902 = vpack.c.b16 %v727, %v726
  %v903 = vpack.c.b16 %v729, %v728
  %v904 = vpack.c.b16 %v731, %v730
  %v905 = vpack.c.b16 %v733, %v732
  %v906 = vpack.c.b16 %v735, %v734
  %v907 = vpack.c.b16 %v737, %v736
  %v908 = vpack.c.b16 %v739, %v738
  %v909 = vpack.c.b16 %v741, %v740
  %v910 = vpack.c.b16 %v743, %v742
  %v911 = vpack.c.b16 %v745, %v744
  %v912 = vpack.c.b16 %v747, %v746
  %v913 = vpack.c.b16 %v749, %v748
  %v914 = vpack.c.b16 %v751, %v750
  %v915 = vpack.c.b16 %v753, %v752
  %v916 = vpack.c.b16 %v755, %v754
  %v917 = vpack.c.b16 %v757, %v756
  %v918 = vpack.c.b16 %v759, %v758
  %v919 = vpack.c.b16 %v761, %v760
  %v920 = vpack.c.b16 %v763, %v762
  %v921 = vpack.c.b16 %v765, %v764
  %v922 = vpack.c.b16 %v767, %v766
  %v923 = vpack.c.b16 %v769, %v768
  %v924 = vpack.c.b16 %v771, %v770
  %v925 = vpack.c.b16 %v773, %v772
  %v926 = vpack.c.b16 %v775, %v774
  %v927 = vpack.c.b16 %v777, %v776
  %v928 = vpack.c.b16 %v779, %v778
  %v929 = vpack.c.b16 %v781, %v780
  %v930 = vpack.c.b16 %v783, %v782
  %v931 = vpack.c.b16 %v785, %v784
  %v932 = vpack.c.b16 %v787, %v786
  %v933 = vpack.c.b16 %v789, %v788
  %v934 = vpack.c.b16 %v791, %v790
  %v935 = vpack.c.b16 %v793, %v792
  %v936 = vpack.c.b16 %v795, %v794
  %v937 = vpack.c.b16 %v797, %v796
  %v938 = vpack.c.b16 %v799, %v798
  %v939 = vpack.c.b16 %v801, %v800
  %v940 = vpack.c.b16 %v803, %v802
  %v941 = vpack.c.b16 %v805, %v804
  %v942 = vpack.c.b16 %v807, %v806
  %v943 = vpack.c.b16 %v809, %v808
  %v944 = vpack.c.b16 %v811, %v810
  %v945 = vpack.c.b16 %v813, %v812
  %v946 = vpack.c.b16 %v815, %v814
  %v947 = vpack.c.b16 %v817, %v816
  %v948 = vpack.c.b16 %v819, %v818
  %v949 = vpack.c.b16 %v821, %v820
  %v950 = vpack.c.b16 %v823, %v822
  %v951 = vpack.c.b16 %v825, %v824
  %v952 = vpack.c.b16 %v827, %v826
  %v953 = vpack.c.b16 %v829, %v828
  %v954 = vpack.c.b16 %v831, %v830
  %v955 = vpack.c.b16 %v833, %v832
  %v956 = vpack.c.b16 %v835, %v834
  %v957 = vpack.c.b16 %v837, %v836
  %1078 = vmatpush.bf16.msra.mxu0 %v845
  %1079 = vmatpush.bf16.msra.mxu0 %v844
  %1080 = vmatpush.bf16.msra.mxu0 %v843
  %1081 = vmatpush.bf16.msra.mxu0 %v842
  %1082 = vmatpush.bf16.msra.mxu0 %v841
  %1083 = vmatpush.bf16.msra.mxu0 %v840
  %1084 = vmatpush.bf16.msra.mxu0 %v839
  %1085 = vmatpush.bf16.msra.mxu0 %v838
  %1086 = vmatmul.bf16.gmra.mxu0 %v328
  %v1087 = vpop.f32.mrf.mxu0
  %v1088 = vadd.f32 %v280, %v1087
  %v1089 = vpop.f32.mrf.mxu0
  %v1090 = vadd.f32 %v280, %v1089
  %1091 = vdwg.mxu0
  %1092 = vmatpush.bf16.msra.mxu0 %v853
  %1093 = vmatpush.bf16.msra.mxu0 %v852
  %1094 = vmatpush.bf16.msra.mxu0 %v851
  %1095 = vmatpush.bf16.msra.mxu0 %v850
  %1096 = vmatpush.bf16.msra.mxu0 %v849
  %1097 = vmatpush.bf16.msra.mxu0 %v848
  %1098 = vmatpush.bf16.msra.mxu0 %v847
  %1099 = vmatpush.bf16.msra.mxu0 %v846
  %1100 = vmatmul.bf16.gmra.mxu0 %v329
  %v1101 = vpop.f32.mrf.mxu0
  %v1102 = vadd.f32 %v1088, %v1101
  %v1103 = vpop.f32.mrf.mxu0
  %v1104 = vadd.f32 %v1090, %v1103
  %1105 = vdwg.mxu0
  %1106 = vmatpush.bf16.msra.mxu0 %v861
  %1107 = vmatpush.bf16.msra.mxu0 %v860
  %1108 = vmatpush.bf16.msra.mxu0 %v859
  %1109 = vmatpush.bf16.msra.mxu0 %v858
  %1110 = vmatpush.bf16.msra.mxu0 %v857
  %1111 = vmatpush.bf16.msra.mxu0 %v856
  %1112 = vmatpush.bf16.msra.mxu0 %v855
  %1113 = vmatpush.bf16.msra.mxu0 %v854
  %1114 = vmatmul.bf16.gmra.mxu0 %v330
  %v1115 = vpop.f32.mrf.mxu0
  %v1116 = vadd.f32 %v1102, %v1115
  %v1117 = vpop.f32.mrf.mxu0
  %v1118 = vadd.f32 %v1104, %v1117
  %1119 = vdwg.mxu0
  %1120 = vmatpush.bf16.msra.mxu0 %v869
  %1121 = vmatpush.bf16.msra.mxu0 %v868
  %1122 = vmatpush.bf16.msra.mxu0 %v867
  %1123 = vmatpush.bf16.msra.mxu0 %v866
  %1124 = vmatpush.bf16.msra.mxu0 %v865
  %1125 = vmatpush.bf16.msra.mxu0 %v864
  %1126 = vmatpush.bf16.msra.mxu0 %v863
  %1127 = vmatpush.bf16.msra.mxu0 %v862
  %1128 = vmatmul.bf16.gmra.mxu0 %v331
  %v1129 = vpop.f32.mrf.mxu0
  %v1130 = vadd.f32 %v1116, %v1129
  %v1131 = vpop.f32.mrf.mxu0
  %v1132 = vadd.f32 %v1118, %v1131
  %1133 = vdwg.mxu0
  %1134 = vmatpush.bf16.msra.mxu0 %v877
  %1135 = vmatpush.bf16.msra.mxu0 %v876
  %1136 = vmatpush.bf16.msra.mxu0 %v875
  %1137 = vmatpush.bf16.msra.mxu0 %v874
  %1138 = vmatpush.bf16.msra.mxu0 %v873
  %1139 = vmatpush.bf16.msra.mxu0 %v872
  %1140 = vmatpush.bf16.msra.mxu0 %v871
  %1141 = vmatpush.bf16.msra.mxu0 %v870
  %1142 = vmatmul.bf16.gmra.mxu0 %v332
  %v1143 = vpop.f32.mrf.mxu0
  %v1144 = vadd.f32 %v1130, %v1143
  %v1145 = vpop.f32.mrf.mxu0
  %v1146 = vadd.f32 %v1132, %v1145
  %1147 = vdwg.mxu0
  %1148 = vmatpush.bf16.msra.mxu0 %v885
  %1149 = vmatpush.bf16.msra.mxu0 %v884
  %1150 = vmatpush.bf16.msra.mxu0 %v883
  %1151 = vmatpush.bf16.msra.mxu0 %v882
  %1152 = vmatpush.bf16.msra.mxu0 %v881
  %1153 = vmatpush.bf16.msra.mxu0 %v880
  %1154 = vmatpush.bf16.msra.mxu0 %v879
  %1155 = vmatpush.bf16.msra.mxu0 %v878
  %1156 = vmatmul.bf16.gmra.mxu0 %v333
  %v1157 = vpop.f32.mrf.mxu0
  %v1158 = vadd.f32 %v1144, %v1157
  %v1159 = vpop.f32.mrf.mxu0
  %v1160 = vadd.f32 %v1146, %v1159
  %1161 = vdwg.mxu0
  %1162 = vmatpush.bf16.msra.mxu0 %v893
  %1163 = vmatpush.bf16.msra.mxu0 %v892
  %1164 = vmatpush.bf16.msra.mxu0 %v891
  %1165 = vmatpush.bf16.msra.mxu0 %v890
  %1166 = vmatpush.bf16.msra.mxu0 %v889
  %1167 = vmatpush.bf16.msra.mxu0 %v888
  %1168 = vmatpush.bf16.msra.mxu0 %v887
  %1169 = vmatpush.bf16.msra.mxu0 %v886
  %1170 = vmatmul.bf16.gmra.mxu0 %v334
  %v1171 = vpop.f32.mrf.mxu0
  %v1172 = vadd.f32 %v1158, %v1171
  %v1173 = vpop.f32.mrf.mxu0
  %v1174 = vadd.f32 %v1160, %v1173
  %1175 = vdwg.mxu0
  %1176 = vmatpush.bf16.msra.mxu0 %v901
  %1177 = vmatpush.bf16.msra.mxu0 %v900
  %1178 = vmatpush.bf16.msra.mxu0 %v899
  %1179 = vmatpush.bf16.msra.mxu0 %v898
  %1180 = vmatpush.bf16.msra.mxu0 %v897
  %1181 = vmatpush.bf16.msra.mxu0 %v896
  %1182 = vmatpush.bf16.msra.mxu0 %v895
  %1183 = vmatpush.bf16.msra.mxu0 %v894
  %1184 = vmatmul.bf16.gmra.mxu0 %v335
  %v1185 = vpop.f32.mrf.mxu0
  %v1186 = vadd.f32 %v1172, %v1185
  %v1187 = vpop.f32.mrf.mxu0
  %v1188 = vadd.f32 %v1174, %v1187
  %1189 = vdwg.mxu0
  %1190 = vmatpush.bf16.msra.mxu0 %v909
  %1191 = vmatpush.bf16.msra.mxu0 %v908
  %1192 = vmatpush.bf16.msra.mxu0 %v907
  %1193 = vmatpush.bf16.msra.mxu0 %v906
  %1194 = vmatpush.bf16.msra.mxu0 %v905
  %1195 = vmatpush.bf16.msra.mxu0 %v904
  %1196 = vmatpush.bf16.msra.mxu0 %v903
  %1197 = vmatpush.bf16.msra.mxu0 %v902
  %1198 = vmatmul.bf16.gmra.mxu0 %v336
  %v1199 = vpop.f32.mrf.mxu0
  %v1200 = vadd.f32 %v1186, %v1199
  %v1201 = vpop.f32.mrf.mxu0
  %v1202 = vadd.f32 %v1188, %v1201
  %1203 = vdwg.mxu0
  %1204 = vmatpush.bf16.msra.mxu0 %v917
  %1205 = vmatpush.bf16.msra.mxu0 %v916
  %1206 = vmatpush.bf16.msra.mxu0 %v915
  %1207 = vmatpush.bf16.msra.mxu0 %v914
  %1208 = vmatpush.bf16.msra.mxu0 %v913
  %1209 = vmatpush.bf16.msra.mxu0 %v912
  %1210 = vmatpush.bf16.msra.mxu0 %v911
  %1211 = vmatpush.bf16.msra.mxu0 %v910
  %1212 = vmatmul.bf16.gmra.mxu0 %v337
  %v1213 = vpop.f32.mrf.mxu0
  %v1214 = vadd.f32 %v1200, %v1213
  %v1215 = vpop.f32.mrf.mxu0
  %v1216 = vadd.f32 %v1202, %v1215
  %1217 = vdwg.mxu0
  %1218 = vmatpush.bf16.msra.mxu0 %v925
  %1219 = vmatpush.bf16.msra.mxu0 %v924
  %1220 = vmatpush.bf16.msra.mxu0 %v923
  %1221 = vmatpush.bf16.msra.mxu0 %v922
  %1222 = vmatpush.bf16.msra.mxu0 %v921
  %1223 = vmatpush.bf16.msra.mxu0 %v920
  %1224 = vmatpush.bf16.msra.mxu0 %v919
  %1225 = vmatpush.bf16.msra.mxu0 %v918
  %1226 = vmatmul.bf16.gmra.mxu0 %v338
  %v1227 = vpop.f32.mrf.mxu0
  %v1228 = vadd.f32 %v1214, %v1227
  %v1229 = vpop.f32.mrf.mxu0
  %v1230 = vadd.f32 %v1216, %v1229
  %1231 = vdwg.mxu0
  %1232 = vmatpush.bf16.msra.mxu0 %v933
  %1233 = vmatpush.bf16.msra.mxu0 %v932
  %1234 = vmatpush.bf16.msra.mxu0 %v931
  %1235 = vmatpush.bf16.msra.mxu0 %v930
  %1236 = vmatpush.bf16.msra.mxu0 %v929
  %1237 = vmatpush.bf16.msra.mxu0 %v928
  %1238 = vmatpush.bf16.msra.mxu0 %v927
  %1239 = vmatpush.bf16.msra.mxu0 %v926
  %1240 = vmatmul.bf16.gmra.mxu0 %v339
  %v1241 = vpop.f32.mrf.mxu0
  %v1242 = vadd.f32 %v1228, %v1241
  %v1243 = vpop.f32.mrf.mxu0
  %v1244 = vadd.f32 %v1230, %v1243
  %1245 = vdwg.mxu0
  %1246 = vmatpush.bf16.msra.mxu0 %v941
  %1247 = vmatpush.bf16.msra.mxu0 %v940
  %1248 = vmatpush.bf16.msra.mxu0 %v939
  %1249 = vmatpush.bf16.msra.mxu0 %v938
  %1250 = vmatpush.bf16.msra.mxu0 %v937
  %1251 = vmatpush.bf16.msra.mxu0 %v936
  %1252 = vmatpush.bf16.msra.mxu0 %v935
  %1253 = vmatpush.bf16.msra.mxu0 %v934
  %1254 = vmatmul.bf16.gmra.mxu0 %v340
  %v1255 = vpop.f32.mrf.mxu0
  %v1256 = vadd.f32 %v1242, %v1255
  %v1257 = vpop.f32.mrf.mxu0
  %v1258 = vadd.f32 %v1244, %v1257
  %1259 = vdwg.mxu0
  %1260 = vmatpush.bf16.msra.mxu0 %v949
  %1261 = vmatpush.bf16.msra.mxu0 %v948
  %1262 = vmatpush.bf16.msra.mxu0 %v947
  %1263 = vmatpush.bf16.msra.mxu0 %v946
  %1264 = vmatpush.bf16.msra.mxu0 %v945
  %1265 = vmatpush.bf16.msra.mxu0 %v944
  %1266 = vmatpush.bf16.msra.mxu0 %v943
  %1267 = vmatpush.bf16.msra.mxu0 %v942
  %1268 = vmatmul.bf16.gmra.mxu0 %v341
  %v1269 = vpop.f32.mrf.mxu0
  %v1270 = vadd.f32 %v1256, %v1269
  %v1271 = vpop.f32.mrf.mxu0
  %v1272 = vadd.f32 %v1258, %v1271
  %1273 = vdwg.mxu0
  %1274 = vmatpush.bf16.msra.mxu0 %v957
  %1275 = vmatpush.bf16.msra.mxu0 %v956
  %1276 = vmatpush.bf16.msra.mxu0 %v955
  %1277 = vmatpush.bf16.msra.mxu0 %v954
  %1278 = vmatpush.bf16.msra.mxu0 %v953
  %1279 = vmatpush.bf16.msra.mxu0 %v952
  %1280 = vmatpush.bf16.msra.mxu0 %v951
  %1281 = vmatpush.bf16.msra.mxu0 %v950
  %1282 = vmatmul.bf16.gmra.mxu0 %v342
  %v1283 = vpop.f32.mrf.mxu0
  %v1284 = vadd.f32 %v1270, %v1283
  %v1285 = vpop.f32.mrf.mxu0
  %v1286 = vadd.f32 %v1272, %v1285
  %1287 = vdwg.mxu0
  %v1288 = vmax.f32 %v1284, 0.0
  %v1289 = vmax.f32 %v1286, 0.0
  %1290 = vst [vmem:[%s6] sm:$0xff] %v1288
  %1291 = vst [vmem:[%s6 + $0x8] sm:$0xff] %v1289
  %v1292 = vld [vmem:[%s3] sm:$0xff]
  %v1293 = vld [vmem:[%s3 + $0x8] sm:$0xff]
  %v1294 = vld [vmem:[%s3 + $0x10] sm:$0xff]
  %v1295 = vld [vmem:[%s3 + $0x18] sm:$0xff]
  %v1296 = vld [vmem:[%s3 + $0x20] sm:$0xff]
  %v1297 = vld [vmem:[%s3 + $0x28] sm:$0xff]
  %v1298 = vld [vmem:[%s3 + $0x30] sm:$0xff]
  %v1299 = vld [vmem:[%s3 + $0x38] sm:$0xff]
  %v1300 = vld [vmem:[%s3 + $0x40] sm:$0xff]
  %v1301 = vld [vmem:[%s3 + $0x48] sm:$0xff]
  %v1302 = vld [vmem:[%s3 + $0x50] sm:$0xff]
  %v1303 = vld [vmem:[%s3 + $0x58] sm:$0xff]
  %v1304 = vld [vmem:[%s3 + $0x60] sm:$0xff]
  %v1305 = vld [vmem:[%s3 + $0x68] sm:$0xff]
  %v1306 = vld [vmem:[%s3 + $0x70] sm:$0xff]
  %v1307 = vld [vmem:[%s3 + $0x78] sm:$0xff]
  %v1308 = vld [vmem:[%s4] sm:$0x1]
  %v1310 = vperm.slane %v1308, 0
  %1312 = vmatpush.msra.mxu0 %v1307
  %1313 = vmatpush.msra.mxu0 %v1306
  %1314 = vmatpush.msra.mxu0 %v1305
  %1315 = vmatpush.msra.mxu0 %v1304
  %1316 = vmatpush.msra.mxu0 %v1303
  %1317 = vmatpush.msra.mxu0 %v1302
  %1318 = vmatpush.msra.mxu0 %v1301
  %1319 = vmatpush.msra.mxu0 %v1300
  %1320 = vmatpush.msra.mxu0 %v1299
  %1321 = vmatpush.msra.mxu0 %v1298
  %1322 = vmatpush.msra.mxu0 %v1297
  %1323 = vmatpush.msra.mxu0 %v1296
  %1324 = vmatpush.msra.mxu0 %v1295
  %1325 = vmatpush.msra.mxu0 %v1294
  %1326 = vmatpush.msra.mxu0 %v1293
  %1327 = vmatpush.msra.mxu0 %v1292
  %1328 = vmatmul.f32.gmra.mxu0 %v1288
  %v1329 = vpop.f32.mrf.mxu0
  %v1330 = vadd.f32 %v1310, %v1329
  %1331 = vmatmul.f32.gmra.mxu0 %v1289
  %v1332 = vpop.f32.mrf.mxu0
  %v1333 = vadd.f32 %v1310, %v1332
  %1334 = vdwg.mxu0
  %1335 = vst [vmem:[%s5] sm:$0xff] %v1330
  %1336 = vst [vmem:[%s5 + $0x8] sm:$0xff] %v1333
  // Predicated region
  $region22: #{dense_net_head.1} parent=0 // pred_check
    _
  $region23: #{dense_net_head.1} parent=0 // pred_check_branch
    %1338 = sbr.rel (0) target = $region25
  $region24: #{dense_net_head.1} parent=0 // pred_region
    _
  $region25: #{dense_net_head.1} parent=0 // pred_fallthru
    _
  // Predicated region
  $region26: #{dense_net_head.1} parent=0 // pred_check
    _
  $region27: #{dense_net_head.1} parent=0 // pred_check_branch
    %1340 = sbr.rel (0) target = $region29
  $region28: #{dense_net_head.1} parent=0 // pred_region
    _
  $region29: #{dense_net_head.1} parent=0 // pred_fallthru
    _
  // Predicated region
  $region30: #{dense_net_head.1} parent=0 // pred_check
    _
  $region31: #{dense_net_head.1} parent=0 // pred_check_branch
    %1342 = sbr.rel (0) target = $region33
  $region32: #{dense_net_head.1} parent=0 // pred_region
    _
  $region33: #{dense_net_head.1} parent=0 // pred_fallthru
    _
  // Predicated region
  $region34: #{dense_net_head.1} parent=0 // pred_check
    _
  $region35: #{dense_net_head.1} parent=0 // pred_check_branch
    %1344 = sbr.rel (0) target = $region37
  $region36: #{dense_net_head.1} parent=0 // pred_region
    _
  $region37: #{dense_net_head.1} parent=0 // pred_fallthru
    _

</llo_original>
